<compile_context>
chip_gen: v5e
topology: v5e:2x2
jax: 0.10.0
libtpu: 0.0.40
codegen_flags: <defaults>
</compile_context>

<pallas_src>
import jax
import jax.numpy as jnp
from jax.experimental import pallas as pl
from jax.experimental.pallas import tpu as pltpu


# ---------------------------------------------------------------------------
# Pass 1:  m = x @ W_gnn   (reassociated gnn matmul, reused K-slab-wise in pass 2)
# ---------------------------------------------------------------------------
def _proj_kernel(x_ref, w_ref, m_ref):
    xm = x_ref[...].astype(w_ref.dtype)
    m_ref[...] = jnp.dot(xm, w_ref[...],
                         preferred_element_type=jnp.float32).astype(m_ref.dtype)


# ---------------------------------------------------------------------------
# Pass 2:  K-tiled adj @ m with f32 accumulator, gated epilogue at k == last.
#   z    = relu(acc + b_gnn)
#   u    = x @ W_upd + b_upd + z
#   g    = sigmoid(u @ W_gate_u + x @ W_gate_x + b_gate)
#   out  = tanh(u) * g + x * (1 - g)
# ---------------------------------------------------------------------------
def _gated_update_kernel(adj_ref, x_ref, m_ref, w_ug_ref, w_gu_ref, b_ref,
                         out_ref, acc_ref):
    k = pl.program_id(1)

    @pl.when(k == 0)
    def _():
        acc_ref[...] = jnp.zeros_like(acc_ref)

    # Dominant MXU work: one (TM, TK) @ (TK, Hp) slab per grid step, f32 acc.
    acc_ref[...] += jnp.dot(adj_ref[...], m_ref[...],
                            preferred_element_type=jnp.float32)

    @pl.when(k == pl.num_programs(1) - 1)
    def _():
        hp = out_ref.shape[-1]
        b = b_ref[...]                                      # (1, 3*Hp) f32 biases
        z = jnp.maximum(acc_ref[...] + b[:, :hp], 0.0)      # gnn: relu(adj@x@Wg + bg)

        x = x_ref[...]
        xm = x.astype(w_ug_ref.dtype)
        # Fused x-side projections [x@W_upd | x@W_gate_x]; hides under adj DMA.
        ug = jnp.dot(xm, w_ug_ref[...], preferred_element_type=jnp.float32)
        u = ug[:, :hp] + b[:, hp:2 * hp] + z                # update_linear(x) + z
        gate_pre = jnp.dot(u.astype(w_gu_ref.dtype), w_gu_ref[...],
                           preferred_element_type=jnp.float32)
        gate_pre = gate_pre + ug[:, hp:] + b[:, 2 * hp:]

        # f32 epilogue (v5e has no bf16 VPU/EUP path).
        g = jax.nn.sigmoid(gate_pre)
        xf = x.astype(jnp.float32)
        out_ref[...] = (jnp.tanh(u) * g + xf * (1.0 - g)).astype(out_ref.dtype)


# ---------------------------------------------------------------------------
# Wrapper
# ---------------------------------------------------------------------------
def _round_up(x, m):
    return ((x + m - 1) // m) * m


def _pad2(a, rows, cols):
    r, c = a.shape
    return jnp.pad(a, ((0, rows - r), (0, cols - c)))


def prepare_adj(adj, matmul_dtype=jnp.bfloat16):
    """Pad adj to (Np, Np) with Np a multiple of 128 and cast to the MXU feed
    dtype.  Call once and cache when the same graph is reused across layers /
    iterations; gated_gnn() skips its own pad+cast for such inputs."""
    n = adj.shape[0]
    np_ = _round_up(n, 128)
    return _pad2(adj, np_, np_).astype(matmul_dtype)


def _pick_tile(total, candidates):
    for c in candidates:
        if c <= total and total % c == 0:
            return c
    return total


def gated_gnn(x, adj, w_gnn, b_gnn, w_upd, b_upd, w_gate, b_gate, *,
              block_rows=512, block_k=2048, matmul_dtype=jnp.bfloat16,
              vmem_budget_bytes=20 << 20):
    """x: (N, H) f32 node states, adj: (N, N) adjacency (or prepare_adj output).
    Returns (N, H).

    Weights are stored (in_features, out_features), i.e. already transposed
    relative to PyTorch's nn.Linear.weight, so y = x @ W + b.
    """
    N, H = x.shape
    Hp = _round_up(H, 128)          # lane-dense hidden dim
    Np = _round_up(N, 128)          # nodes padded only to the lane quantum

    # Row tile: multiple of 128, divides Np.
    TM = _pick_tile(Np, [t for t in (512, 256, 128) if t <= max(block_rows, 128)])
    item = jnp.dtype(matmul_dtype).itemsize

    def vmem_est(tm, tk):
        return (2 * tm * tk * item          # adj tiles (double-buffered)
                + 2 * tk * Hp * item        # m K-slabs
                + 2 * tm * Hp * 4           # x row block (f32)
                + Hp * 2 * Hp * item        # [W_upd | W_gate_x]  (Buffered(1))
                + Hp * Hp * item            # W_gate_u            (Buffered(1))
                + 3 * Hp * 4                # biases
                + 2 * tm * Hp * 4           # out block
                + tm * Hp * 4)              # f32 accumulator scratch

    # Contraction tile: largest multiple of 128 dividing Np that fits the budget.
    TK = 128
    for cand in (2048, 1024, 512, 256, 128):
        if cand <= max(block_k, 128) and Np % cand == 0 \
                and vmem_est(TM, cand) <= vmem_budget_bytes:
            TK = cand
            break

    # ---- layout plumbing (zero-padded; valid outputs unchanged) ----
    x_p = _pad2(x.astype(jnp.float32), Np, Hp)
    if adj.shape == (Np, Np) and adj.dtype == jnp.dtype(matmul_dtype):
        adj_p = adj                                   # pre-prepared / cached adj
    else:
        adj_p = prepare_adj(adj, matmul_dtype)

    w_gnn_p = _pad2(w_gnn, Hp, Hp).astype(matmul_dtype)
    wg_u = w_gate[:H, :]                              # gate weight for the u part
    wg_x = w_gate[H:, :]                              # gate weight for the x part
    w_ug = jnp.concatenate([_pad2(w_upd, Hp, Hp), _pad2(wg_x, Hp, Hp)],
                           axis=1).astype(matmul_dtype)          # (Hp, 2*Hp)
    w_gu = _pad2(wg_u, Hp, Hp).astype(matmul_dtype)              # (Hp, Hp)
    b_cat = jnp.concatenate(
        [jnp.pad(b_gnn.astype(jnp.float32), (0, Hp - H)),
         jnp.pad(b_upd.astype(jnp.float32), (0, Hp - H)),
         jnp.pad(b_gate.astype(jnp.float32), (0, Hp - H))]).reshape(1, 3 * Hp)

    # ---- pass 1: m = x @ W_gnn ----
    m = pl.pallas_call(
        _proj_kernel,
        out_shape=jax.ShapeDtypeStruct((Np, Hp), matmul_dtype),
        grid=(Np // TM,),
        in_specs=[pl.BlockSpec((TM, Hp), lambda i: (i, 0)),
                  pl.BlockSpec((Hp, Hp), lambda i: (0, 0),
                               pipeline_mode=pl.Buffered(1))],
        out_specs=pl.BlockSpec((TM, Hp), lambda i: (i, 0)),
        compiler_params=pltpu.CompilerParams(
            dimension_semantics=("parallel",)),
    )(x_p, w_gnn_p)

    # ---- pass 2: K-tiled, pipelined gated update ----
    grid = (Np // TM, Np // TK)
    flops = 2 * Np * Np * Hp + 6 * Np * Hp * Hp
    bytes_accessed = (Np * Np * item                     # adj streamed once
                      + (Np // TM) * Np * Hp * item      # m re-read per row block
                      + Np * Hp * 4                      # x
                      + 3 * Hp * Hp * item               # weights
                      + Np * Hp * 4)                     # out
    cost = pl.CostEstimate(flops=flops, transcendentals=2 * Np * Hp,
                           bytes_accessed=bytes_accessed)
    vmem_limit = int(min(max(2 * vmem_est(TM, TK), 32 << 20), 48 << 20))

    out_p = pl.pallas_call(
        _gated_update_kernel,
        out_shape=jax.ShapeDtypeStruct((Np, Hp), x.dtype),
        grid=grid,
        in_specs=[pl.BlockSpec((TM, TK), lambda i, k: (i, k)),      # adj: dominant stream
                  pl.BlockSpec((TM, Hp), lambda i, k: (i, 0)),      # x row block
                  pl.BlockSpec((TK, Hp), lambda i, k: (k, 0)),      # m K-slab
                  pl.BlockSpec((Hp, 2 * Hp), lambda i, k: (0, 0),
                               pipeline_mode=pl.Buffered(1)),       # [W_upd | W_gate_x]
                  pl.BlockSpec((Hp, Hp), lambda i, k: (0, 0),
                               pipeline_mode=pl.Buffered(1)),       # W_gate_u
                  pl.BlockSpec((1, 3 * Hp), lambda i, k: (0, 0),
                               pipeline_mode=pl.Buffered(1))],      # biases
        out_specs=pl.BlockSpec((TM, Hp), lambda i, k: (i, 0)),
        scratch_shapes=[pltpu.VMEM((TM, Hp), jnp.float32)],
        compiler_params=pltpu.CompilerParams(
            dimension_semantics=("parallel", "arbitrary"),
            vmem_limit_bytes=vmem_limit),
        cost_estimate=cost,
    )(adj_p, x_p, m, w_ug, w_gu, b_cat)

    return out_p[:N, :H]


def gated_gnn_ref(x, adj, w_gnn, b_gnn, w_upd, b_upd, w_gate, b_gate):
    """Plain-JAX reference mirroring the PyTorch forward."""
    z = jnp.maximum(adj @ x @ w_gnn + b_gnn, 0.0)
    u = x @ w_upd + b_upd + z
    g = jax.nn.sigmoid(jnp.concatenate([u, x], axis=-1) @ w_gate + b_gate)
    return jnp.tanh(u) * g + x * (1.0 - g)


if __name__ == "__main__":
    # Small shapes: batch=2, nodes_per_graph=8 -> N = 16 flattened nodes, hidden=32.
    N, H = 16, 32
    key = jax.random.PRNGKey(0)
    k = jax.random.split(key, 8)

    x = jax.random.normal(k[0], (N, H), dtype=jnp.float32)

    # Symmetric, row-normalized adjacency with self loops (for the example gnn).
    a = (jax.random.uniform(k[1], (N, N)) > 0.7).astype(jnp.float32)
    a = jnp.maximum(a, a.T) + jnp.eye(N, dtype=jnp.float32)
    adj = a / jnp.sum(a, axis=-1, keepdims=True)

    def linear_init(kw, kb, fan_in, shape_w, shape_b):
        bound = 1.0 / jnp.sqrt(fan_in)
        w = jax.random.uniform(kw, shape_w, minval=-bound, maxval=bound, dtype=jnp.float32)
        b = jax.random.uniform(kb, shape_b, minval=-bound, maxval=bound, dtype=jnp.float32)
        return w, b

    # gnn linear: H -> H ; update_linear: H -> H ; gate_linear: 2H -> H
    w_gnn, b_gnn = linear_init(k[2], k[3], H, (H, H), (H,))
    w_upd, b_upd = linear_init(k[4], k[5], H, (H, H), (H,))
    w_gate, b_gate = linear_init(k[6], k[7], 2 * H, (2 * H, H), (H,))

    ref = gated_gnn_ref(x, adj, w_gnn, b_gnn, w_upd, b_upd, w_gate, b_gate)

    # f32 MXU path: should match the reference tightly.
    out_f32 = jax.block_until_ready(
        gated_gnn(x, adj, w_gnn, b_gnn, w_upd, b_upd, w_gate, b_gate,
                  matmul_dtype=jnp.float32))
    assert out_f32.shape == (N, H)
    assert jnp.allclose(out_f32, ref, atol=1e-4, rtol=1e-4), "f32 path mismatch"

    # bf16-fed MXU path, with the adjacency pre-padded/cast once (cached-graph path).
    adj_prepped = prepare_adj(adj, jnp.bfloat16)
    out_bf16 = jax.block_until_ready(
        gated_gnn(x, adj_prepped, w_gnn, b_gnn, w_upd, b_upd, w_gate, b_gate,
                  matmul_dtype=jnp.bfloat16))
    assert out_bf16.shape == (N, H)
    assert jnp.allclose(out_bf16, ref, atol=5e-2, rtol=5e-2), "bf16 path mismatch"

    print("KERNEL_OK")
</pallas_src>

<mosaic_0001>
module attributes {stable_mosaic.version = 11 : i64} {
  func.func @_proj_kernel(%arg0: i32, %arg1: memref<128x128xf32, #tpu.memory_space<vmem>>, %arg2: memref<128x128xf32, #tpu.memory_space<vmem>>, %arg3: memref<128x128xf32, #tpu.memory_space<vmem>>) attributes {dimension_semantics = [#tpu.dimension_semantics<parallel>], iteration_bounds = array<i64: 1>, scalar_prefetch = 0 : i64, scratch_operands = 0 : i64, tpu.core_type = #tpu.core_type<tc>, window_params = [{transform_indices = @transform_0, window_bounds = array<i64: 128, 128>}, {pipeline_mode = #tpu.pipeline_mode<synchronous>, transform_indices = @transform_1, window_bounds = array<i64: 128, 128>}, {transform_indices = @transform_2, window_bounds = array<i64: 128, 128>}]} {
    %c0 = arith.constant 0 : index
    %c0_0 = arith.constant 0 : index
    %0 = vector.load %arg1[%c0, %c0_0] : memref<128x128xf32, #tpu.memory_space<vmem>>, vector<128x128xf32>
    %c0_1 = arith.constant 0 : index
    %c0_2 = arith.constant 0 : index
    %1 = vector.load %arg2[%c0_1, %c0_2] : memref<128x128xf32, #tpu.memory_space<vmem>>, vector<128x128xf32>
    %cst = arith.constant dense<0.000000e+00> : vector<128x128xf32>
    %2 = tpu.matmul %0, %1, %cst {dimension_numbers = #tpu.dot_dimension_numbers<[1], [0], [0], [1], [0, 0, 1, 1], [], []>} : vector<128x128xf32>, vector<128x128xf32>, vector<128x128xf32> -> vector<128x128xf32>
    %c0_3 = arith.constant 0 : index
    %c0_4 = arith.constant 0 : index
    %3 = vector.load %arg3[%c0_3, %c0_4] : memref<128x128xf32, #tpu.memory_space<vmem>>, vector<128x128xf32>
    tpu.vector_store %arg3[%c0_3, %c0_4], %2 {strides = array<i32>} : memref<128x128xf32, #tpu.memory_space<vmem>>, vector<128x128xf32>,
    return
  }
  func.func @transform_0(%arg0: i32) -> (i32, i32) {
    %c0_i32 = arith.constant 0 : i32
    %c0_i32_0 = arith.constant 0 : i32
    return %arg0, %c0_i32 : i32, i32
  }
  func.func @transform_1(%arg0: i32) -> (i32, i32) {
    %c0_i32 = arith.constant 0 : i32
    %c0_i32_0 = arith.constant 0 : i32
    %c0_i32_1 = arith.constant 0 : i32
    return %c0_i32, %c0_i32_0 : i32, i32
  }
  func.func @transform_2(%arg0: i32) -> (i32, i32) {
    %c0_i32 = arith.constant 0 : i32
    %c0_i32_0 = arith.constant 0 : i32
    return %arg0, %c0_i32 : i32, i32
  }
}

</mosaic_0001>

<llo_original>
// kernel: tpu_custom_call.1
$region0: #{tpu_custom_call.1}
  #allocation0 [shape = 'u32[]', space=smem, size = 0x4, offset = 0x4, fixed_abs, tag = 'smem constant byte address 0x4 - core index']
  #allocation1 [shape = 'u32[72,128]{1,0:T(1,128)}', space=vmem, size = 0x9000, scoped, tag = 'internal scratch']
  %s0 = inlined_call_operand.hbm [shape: f32[128,128], index: 0, kind: input, shape index: {}]
  %s1 = inlined_call_operand.hbm [shape: f32[128,128], index: 1, kind: input, shape index: {}]
  %s2 = inlined_call_operand.hbm [shape: f32[128,128], index: 2, kind: output, shape index: {}]
  %s3 = sld [smem:[#allocation0]]
  $region26: #{tpu_custom_call.1} parent=0
    _
  %s5 = ssub.s32 1, %s3
  %s6 = scalar_select 0, %s5, %s3
  $region1: #{tpu_custom_call.1} parent=0
    #allocation2 [shape = 'u8[65536]{0}', space=vmem, size = 0x10000, scoped, tag = 'input window, operand 0, single buffered']
    #allocation3 [shape = 's32[1]{0}', space=sflag, size = 0x4, scoped, tag = 'scoped memory for tpu_custom_call.1']
    #allocation4 [shape = 's32[1]{0}', space=sflag, size = 0x4, scoped, tag = 'scoped memory for tpu_custom_call.1']
    #allocation5 [shape = 'u8[65536]{0}', space=vmem, size = 0x10000, scoped, tag = 'input window, operand 1, single buffered']
    #allocation6 [shape = 's32[1]{0}', space=sflag, size = 0x4, scoped, tag = 'scoped memory for tpu_custom_call.1']
    #allocation7 [shape = 'u8[65536]{0}', space=vmem, size = 0x10000, scoped, tag = 'output window, operand 0, single buffered']
    %7 = vsyncpa [#allocation3], 0
    %8 = vsyncpa [#allocation6], 0
    %9 = vsyncpa [#allocation4], 0
    // Predicated region
    $region2: #{tpu_custom_call.1} parent=1 // pred_check
      _
    $region3: #{tpu_custom_call.1} parent=1 // pred_check_branch
      %11 = sbr.rel (0) target = $region5
    $region4: #{tpu_custom_call.1} parent=1 // pred_region
      %13 = vsyncadd [#allocation3], 0
      %s14 = sshll.u32 %s0, 4
      %s15 = int_to_ptr.hbm [resolvable:$true] %s14
      %s16 = sshll.u32 [#allocation2], 4
      %s17 = int_to_ptr.vmem [resolvable:$true] %s16
      %22 = dma.hbm_to_vmem [thread:$0]  %s15, 2048, %s17, [#allocation3], 128, 128, 8
    $region5: #{tpu_custom_call.1} parent=1 // pred_fallthru
      _
    // Predicated region
    $region6: #{tpu_custom_call.1} parent=1 // pred_check
      _
    $region7: #{tpu_custom_call.1} parent=1 // pred_check_branch
      %24 = sbr.rel (0) target = $region9
    $region8: #{tpu_custom_call.1} parent=1 // pred_region
      %26 = vsyncadd [#allocation6], 0
      %s27 = sshll.u32 %s1, 4
      %s28 = int_to_ptr.hbm [resolvable:$true] %s27
      %s29 = sshll.u32 [#allocation5], 4
      %s30 = int_to_ptr.vmem [resolvable:$true] %s29
      %35 = dma.hbm_to_vmem [thread:$0]  %s28, 2048, %s30, [#allocation6], 128, 128, 8
    $region9: #{tpu_custom_call.1} parent=1 // pred_fallthru
      _
    // Predicated region
    $region10: #{tpu_custom_call.1} parent=1 // pred_check
      _
    $region11: #{tpu_custom_call.1} parent=1 // pred_check_branch
      %37 = sbr.rel (0) target = $region13
    $region12: #{tpu_custom_call.1} parent=1 // pred_region
      %39 = dma.done [#allocation3], 2048
    $region13: #{tpu_custom_call.1} parent=1 // pred_fallthru
      _
    // Predicated region
    $region14: #{tpu_custom_call.1} parent=1 // pred_check
      _
    $region15: #{tpu_custom_call.1} parent=1 // pred_check_branch
      %41 = sbr.rel (0) target = $region17
    $region16: #{tpu_custom_call.1} parent=1 // pred_region
      %43 = dma.done [#allocation6], 2048
    $region17: #{tpu_custom_call.1} parent=1 // pred_fallthru
      _
    %v44 = vld [vmem:[#allocation2] sm:$0xff]
    %v45 = vld [vmem:[#allocation2 + $0x8] sm:$0xff]
    %v46 = vld [vmem:[#allocation2 + $0x10] sm:$0xff]
    %v47 = vld [vmem:[#allocation2 + $0x18] sm:$0xff]
    %v48 = vld [vmem:[#allocation2 + $0x20] sm:$0xff]
    %v49 = vld [vmem:[#allocation2 + $0x28] sm:$0xff]
    %v50 = vld [vmem:[#allocation2 + $0x30] sm:$0xff]
    %v51 = vld [vmem:[#allocation2 + $0x38] sm:$0xff]
    %v52 = vld [vmem:[#allocation2 + $0x40] sm:$0xff]
    %v53 = vld [vmem:[#allocation2 + $0x48] sm:$0xff]
    %v54 = vld [vmem:[#allocation2 + $0x50] sm:$0xff]
    %v55 = vld [vmem:[#allocation2 + $0x58] sm:$0xff]
    %v56 = vld [vmem:[#allocation2 + $0x60] sm:$0xff]
    %v57 = vld [vmem:[#allocation2 + $0x68] sm:$0xff]
    %v58 = vld [vmem:[#allocation2 + $0x70] sm:$0xff]
    %v59 = vld [vmem:[#allocation2 + $0x78] sm:$0xff]
    %v60 = vld [vmem:[#allocation5] sm:$0xff]
    %v61 = vld [vmem:[#allocation5 + $0x8] sm:$0xff]
    %v62 = vld [vmem:[#allocation5 + $0x10] sm:$0xff]
    %v63 = vld [vmem:[#allocation5 + $0x18] sm:$0xff]
    %v64 = vld [vmem:[#allocation5 + $0x20] sm:$0xff]
    %v65 = vld [vmem:[#allocation5 + $0x28] sm:$0xff]
    %v66 = vld [vmem:[#allocation5 + $0x30] sm:$0xff]
    %v67 = vld [vmem:[#allocation5 + $0x38] sm:$0xff]
    %v68 = vld [vmem:[#allocation5 + $0x40] sm:$0xff]
    %v69 = vld [vmem:[#allocation5 + $0x48] sm:$0xff]
    %v70 = vld [vmem:[#allocation5 + $0x50] sm:$0xff]
    %v71 = vld [vmem:[#allocation5 + $0x58] sm:$0xff]
    %v72 = vld [vmem:[#allocation5 + $0x60] sm:$0xff]
    %v73 = vld [vmem:[#allocation5 + $0x68] sm:$0xff]
    %v74 = vld [vmem:[#allocation5 + $0x70] sm:$0xff]
    %v75 = vld [vmem:[#allocation5 + $0x78] sm:$0xff]
    %76 = vmatpush.msra.mxu0 %v75
    %77 = vmatpush.msra.mxu0 %v74
    %78 = vmatpush.msra.mxu0 %v73
    %79 = vmatpush.msra.mxu0 %v72
    %80 = vmatpush.msra.mxu0 %v71
    %81 = vmatpush.msra.mxu0 %v70
    %82 = vmatpush.msra.mxu0 %v69
    %83 = vmatpush.msra.mxu0 %v68
    %84 = vmatpush.msra.mxu0 %v67
    %85 = vmatpush.msra.mxu0 %v66
    %86 = vmatpush.msra.mxu0 %v65
    %87 = vmatpush.msra.mxu0 %v64
    %88 = vmatpush.msra.mxu0 %v63
    %89 = vmatpush.msra.mxu0 %v62
    %90 = vmatpush.msra.mxu0 %v61
    %91 = vmatpush.msra.mxu0 %v60
    %92 = vmatmul.f32.gmra.mxu0 %v44
    %v93 = vpop.f32.mrf.mxu0
    %v94 = vadd.f32 0.0, %v93
    %95 = vmatmul.f32.gmra.mxu0 %v45
    %v96 = vpop.f32.mrf.mxu0
    %v97 = vadd.f32 0.0, %v96
    %98 = vmatmul.f32.gmra.mxu0 %v46
    %v99 = vpop.f32.mrf.mxu0
    %v100 = vadd.f32 0.0, %v99
    %101 = vmatmul.f32.gmra.mxu0 %v47
    %v102 = vpop.f32.mrf.mxu0
    %v103 = vadd.f32 0.0, %v102
    %104 = vmatmul.f32.gmra.mxu0 %v48
    %v105 = vpop.f32.mrf.mxu0
    %v106 = vadd.f32 0.0, %v105
    %107 = vmatmul.f32.gmra.mxu0 %v49
    %v108 = vpop.f32.mrf.mxu0
    %v109 = vadd.f32 0.0, %v108
    %110 = vmatmul.f32.gmra.mxu0 %v50
    %v111 = vpop.f32.mrf.mxu0
    %v112 = vadd.f32 0.0, %v111
    %113 = vmatmul.f32.gmra.mxu0 %v51
    %v114 = vpop.f32.mrf.mxu0
    %v115 = vadd.f32 0.0, %v114
    %116 = vmatmul.f32.gmra.mxu0 %v52
    %v117 = vpop.f32.mrf.mxu0
    %v118 = vadd.f32 0.0, %v117
    %119 = vmatmul.f32.gmra.mxu0 %v53
    %v120 = vpop.f32.mrf.mxu0
    %v121 = vadd.f32 0.0, %v120
    %122 = vmatmul.f32.gmra.mxu0 %v54
    %v123 = vpop.f32.mrf.mxu0
    %v124 = vadd.f32 0.0, %v123
    %125 = vmatmul.f32.gmra.mxu0 %v55
    %v126 = vpop.f32.mrf.mxu0
    %v127 = vadd.f32 0.0, %v126
    %128 = vmatmul.f32.gmra.mxu0 %v56
    %v129 = vpop.f32.mrf.mxu0
    %v130 = vadd.f32 0.0, %v129
    %131 = vmatmul.f32.gmra.mxu0 %v57
    %v132 = vpop.f32.mrf.mxu0
    %v133 = vadd.f32 0.0, %v132
    %134 = vmatmul.f32.gmra.mxu0 %v58
    %v135 = vpop.f32.mrf.mxu0
    %v136 = vadd.f32 0.0, %v135
    %137 = vmatmul.f32.gmra.mxu0 %v59
    %v138 = vpop.f32.mrf.mxu0
    %v139 = vadd.f32 0.0, %v138
    %140 = vdwg.mxu0
    %141 = vst [vmem:[#allocation7] sm:$0xff] %v94
    %142 = vst [vmem:[#allocation7 + $0x8] sm:$0xff] %v97
    %143 = vst [vmem:[#allocation7 + $0x10] sm:$0xff] %v100
    %144 = vst [vmem:[#allocation7 + $0x18] sm:$0xff] %v103
    %145 = vst [vmem:[#allocation7 + $0x20] sm:$0xff] %v106
    %146 = vst [vmem:[#allocation7 + $0x28] sm:$0xff] %v109
    %147 = vst [vmem:[#allocation7 + $0x30] sm:$0xff] %v112
    %148 = vst [vmem:[#allocation7 + $0x38] sm:$0xff] %v115
    %149 = vst [vmem:[#allocation7 + $0x40] sm:$0xff] %v118
    %150 = vst [vmem:[#allocation7 + $0x48] sm:$0xff] %v121
    %151 = vst [vmem:[#allocation7 + $0x50] sm:$0xff] %v124
    %152 = vst [vmem:[#allocation7 + $0x58] sm:$0xff] %v127
    %153 = vst [vmem:[#allocation7 + $0x60] sm:$0xff] %v130
    %154 = vst [vmem:[#allocation7 + $0x68] sm:$0xff] %v133
    %155 = vst [vmem:[#allocation7 + $0x70] sm:$0xff] %v136
    %156 = vst [vmem:[#allocation7 + $0x78] sm:$0xff] %v139
    // Predicated region
    $region18: #{tpu_custom_call.1} parent=1 // pred_check
      _
    $region19: #{tpu_custom_call.1} parent=1 // pred_check_branch
      %158 = sbr.rel (0) target = $region21
    $region20: #{tpu_custom_call.1} parent=1 // pred_region
      %160 = vsyncadd [#allocation4], 0
      %s161 = sshll.u32 [#allocation7], 4
      %s162 = int_to_ptr.vmem [resolvable:$true] %s161
      %s163 = sshll.u32 %s2, 4
      %s164 = int_to_ptr.hbm [resolvable:$true] %s163
      %169 = dma.vmem_to_hbm [thread:$0]  %s162, 2048, %s164, [#allocation4], 128, 128, 8
    $region21: #{tpu_custom_call.1} parent=1 // pred_fallthru
      _
    // Predicated region
    $region22: #{tpu_custom_call.1} parent=1 // pred_check
      _
    $region23: #{tpu_custom_call.1} parent=1 // pred_check_branch
      %171 = sbr.rel (0) target = $region25
    $region24: #{tpu_custom_call.1} parent=1 // pred_region
      %173 = dma.done [#allocation4], 2048
    $region25: #{tpu_custom_call.1} parent=1 // pred_fallthru
      _
    %174 = vsyncpa [#allocation3], 1
    %175 = vsyncpa [#allocation6], 1
    %176 = vsyncpa [#allocation4], 1

</llo_original>
